<compile_context>
chip_gen: v7x
topology: tpu7x:2x2x1
jax: 0.10.0
libtpu: 0.0.40
codegen_flags: <defaults>
</compile_context>

<pallas_src>
import jax
import jax.numpy as jnp
from jax.experimental import pallas as pl
from jax.experimental.pallas import tpu as pltpu
import numpy as np


def _mm4(P, Q):
    """Batched 4x4 matmul with the batch in the trailing lane dim.

    P, Q: (4, 4, TB) float32.  R[i, j, b] = sum_k P[i, k, b] * Q[k, j, b].
    Unrolled over k: 4 broadcasted multiplies + 3 adds on (4, 4, TB) slabs.
    """
    r = P[:, 0:1, :] * Q[0:1, :, :]
    for k in range(1, 4):
        r = r + P[:, k:k + 1, :] * Q[k:k + 1, :, :]
    return r


def _n3_kernel(i_ref, o_ref):
    # i_ref: (n,   4, 4, TB)  lane-packed chain of transforms for TB batch elems
    # o_ref: (n+1, 4, 4, TB)  cumulative prefix products
    n = i_ref.shape[0]
    P = i_ref[0].astype(jnp.float32)          # running prefix product, (4, 4, TB)
    o_ref[0] = P.astype(o_ref.dtype)
    # n is a (small, static) kinematic-chain length -> fully unroll so the LLO
    # scheduler can co-issue the per-step FMAs.
    # TODO(synk): switch to lax.fori_loop for very long chains (code size).
    for q in range(1, n):
        P = _mm4(P, i_ref[q].astype(jnp.float32))
        o_ref[q] = P.astype(o_ref.dtype)
    o_ref[n] = P.astype(o_ref.dtype)          # out[n] == out[n-1] (full product)


def _round_up(x, m):
    return ((x + m - 1) // m) * m


def n3_forward(I, *, lane_tile=256):
    """Pallas implementation of N3.forward. I: (B, n, 4, 4) -> (B, n+1, 4, 4)."""
    B, n = I.shape[0], I.shape[1]
    # Lane-pack the batch: (B, n, 4, 4) -> (n, 4, 4, B); pad B to a multiple of
    # the lane tile (>= 128) so blocks are lane-dense. Zero padding is safe
    # (products of zero matrices stay zero) and is sliced off afterwards.
    It = jnp.transpose(I, (1, 2, 3, 0))
    TB = min(_round_up(lane_tile, 128), _round_up(B, 128))
    B_pad = _round_up(B, TB)
    if B_pad != B:
        It = jnp.pad(It, ((0, 0), (0, 0), (0, 0), (0, B_pad - B)))

    out = pl.pallas_call(
        _n3_kernel,
        out_shape=jax.ShapeDtypeStruct((n + 1, 4, 4, B_pad), I.dtype),
        grid=(B_pad // TB,),
        in_specs=[pl.BlockSpec((n, 4, 4, TB), lambda b: (0, 0, 0, b))],
        out_specs=pl.BlockSpec((n + 1, 4, 4, TB), lambda b: (0, 0, 0, b)),
        compiler_params=pltpu.CompilerParams(dimension_semantics=("parallel",)),
    )(It)
    # Back to the module's layout: (B, n+1, 4, 4).
    return jnp.transpose(out[..., :B], (3, 0, 1, 2))


def n3_reference(I):
    """Literal JAX transcription of the PyTorch N3.forward (for verification)."""
    B, n = I.shape[0], I.shape[1]
    A = jnp.eye(4, dtype=I.dtype)
    b = jnp.tril(jnp.ones((n + 1, n), I.dtype)).reshape(-1)
    c = jnp.triu(jnp.ones((n + 1, n), I.dtype), k=1).reshape(-1)
    maskIlower = jnp.einsum('ij,k->kij', A, b).reshape(n + 1, n, 4, 4)
    maskIupper = jnp.einsum('ij,k->kij', A, c).reshape(n + 1, n, 4, 4)
    out1 = jnp.matmul(maskIlower, I.reshape(B, 1, n, 4, 4)) + maskIupper
    out1 = jnp.transpose(out1, (0, 2, 1, 3, 4))                 # (B, n, n+1, 4, 4)
    out = jnp.broadcast_to(jnp.eye(4, dtype=I.dtype), (B, n + 1, 4, 4))
    for q in range(n):
        out = jnp.matmul(out, out1[:, q])
    return out


if __name__ == "__main__":
    # N3 has no learnable parameters; only the input transform chain I.
    B, n_in = 2, 8
    key = jax.random.PRNGKey(0)
    I = jax.random.normal(key, (B, n_in, 4, 4), dtype=jnp.float32)

    out = jax.block_until_ready(n3_forward(I))
    ref = jax.block_until_ready(n3_reference(I))

    assert out.shape == (B, n_in + 1, 4, 4)
    np.testing.assert_allclose(np.asarray(out), np.asarray(ref), rtol=1e-5, atol=1e-5)
    print("KERNEL_OK")
</pallas_src>

<mosaic_0001>
module attributes {stable_mosaic.version = 11 : i64} {
  func.func @_n3_kernel(%arg0: i32, %arg1: memref<8x4x4x128xf32, #tpu.memory_space<vmem>>, %arg2: memref<9x4x4x128xf32, #tpu.memory_space<vmem>>) attributes {dimension_semantics = [#tpu.dimension_semantics<parallel>], iteration_bounds = array<i64: 1>, scalar_prefetch = 0 : i64, scratch_operands = 0 : i64, tpu.core_type = #tpu.core_type<tc>, window_params = [{transform_indices = @transform_0, window_bounds = array<i64: 8, 4, 4, 128>}, {transform_indices = @transform_1, window_bounds = array<i64: 9, 4, 4, 128>}]} {
    %c0 = arith.constant 0 : index
    %c0_0 = arith.constant 0 : index
    %c0_1 = arith.constant 0 : index
    %c0_2 = arith.constant 0 : index
    %0 = vector.load %arg1[%c0, %c0_0, %c0_1, %c0_2] : memref<8x4x4x128xf32, #tpu.memory_space<vmem>>, vector<1x4x4x128xf32>
    %1 = vector.shape_cast %0 : vector<1x4x4x128xf32> to vector<4x4x128xf32>
    %c0_3 = arith.constant 0 : index
    %c0_4 = arith.constant 0 : index
    %c0_5 = arith.constant 0 : index
    %c0_6 = arith.constant 0 : index
    %2 = vector.load %arg2[%c0_3, %c0_4, %c0_5, %c0_6] : memref<9x4x4x128xf32, #tpu.memory_space<vmem>>, vector<1x4x4x128xf32>
    %3 = vector.shape_cast %2 : vector<1x4x4x128xf32> to vector<4x4x128xf32>
    %4 = vector.shape_cast %1 : vector<4x4x128xf32> to vector<1x4x4x128xf32>
    tpu.vector_store %arg2[%c0_3, %c0_4, %c0_5, %c0_6], %4 {strides = array<i32>} : memref<9x4x4x128xf32, #tpu.memory_space<vmem>>, vector<1x4x4x128xf32>,
    %c1 = arith.constant 1 : index
    %c0_7 = arith.constant 0 : index
    %c0_8 = arith.constant 0 : index
    %c0_9 = arith.constant 0 : index
    %5 = vector.load %arg1[%c1, %c0_7, %c0_8, %c0_9] : memref<8x4x4x128xf32, #tpu.memory_space<vmem>>, vector<1x4x4x128xf32>
    %6 = vector.shape_cast %5 : vector<1x4x4x128xf32> to vector<4x4x128xf32>
    %7 = vector.extract_strided_slice %1 {offsets = [0, 0, 0], sizes = [4, 1, 128], strides = [1, 1, 1]} : vector<4x4x128xf32> to vector<4x1x128xf32>
    %8 = vector.extract_strided_slice %6 {offsets = [0, 0, 0], sizes = [1, 4, 128], strides = [1, 1, 1]} : vector<4x4x128xf32> to vector<1x4x128xf32>
    %9 = vector.broadcast %7 : vector<4x1x128xf32> to vector<4x4x128xf32>
    %10 = vector.broadcast %8 : vector<1x4x128xf32> to vector<4x4x128xf32>
    %11 = arith.mulf %9, %10 : vector<4x4x128xf32>
    %12 = vector.extract_strided_slice %1 {offsets = [0, 1, 0], sizes = [4, 1, 128], strides = [1, 1, 1]} : vector<4x4x128xf32> to vector<4x1x128xf32>
    %13 = vector.extract_strided_slice %6 {offsets = [1, 0, 0], sizes = [1, 4, 128], strides = [1, 1, 1]} : vector<4x4x128xf32> to vector<1x4x128xf32>
    %14 = vector.broadcast %12 : vector<4x1x128xf32> to vector<4x4x128xf32>
    %15 = vector.broadcast %13 : vector<1x4x128xf32> to vector<4x4x128xf32>
    %16 = arith.mulf %14, %15 : vector<4x4x128xf32>
    %17 = arith.addf %11, %16 : vector<4x4x128xf32>
    %18 = vector.extract_strided_slice %1 {offsets = [0, 2, 0], sizes = [4, 1, 128], strides = [1, 1, 1]} : vector<4x4x128xf32> to vector<4x1x128xf32>
    %19 = vector.extract_strided_slice %6 {offsets = [2, 0, 0], sizes = [1, 4, 128], strides = [1, 1, 1]} : vector<4x4x128xf32> to vector<1x4x128xf32>
    %20 = vector.broadcast %18 : vector<4x1x128xf32> to vector<4x4x128xf32>
    %21 = vector.broadcast %19 : vector<1x4x128xf32> to vector<4x4x128xf32>
    %22 = arith.mulf %20, %21 : vector<4x4x128xf32>
    %23 = arith.addf %17, %22 : vector<4x4x128xf32>
    %24 = vector.extract_strided_slice %1 {offsets = [0, 3, 0], sizes = [4, 1, 128], strides = [1, 1, 1]} : vector<4x4x128xf32> to vector<4x1x128xf32>
    %25 = vector.extract_strided_slice %6 {offsets = [3, 0, 0], sizes = [1, 4, 128], strides = [1, 1, 1]} : vector<4x4x128xf32> to vector<1x4x128xf32>
    %26 = vector.broadcast %24 : vector<4x1x128xf32> to vector<4x4x128xf32>
    %27 = vector.broadcast %25 : vector<1x4x128xf32> to vector<4x4x128xf32>
    %28 = arith.mulf %26, %27 : vector<4x4x128xf32>
    %29 = arith.addf %23, %28 : vector<4x4x128xf32>
    %c1_10 = arith.constant 1 : index
    %c0_11 = arith.constant 0 : index
    %c0_12 = arith.constant 0 : index
    %c0_13 = arith.constant 0 : index
    %30 = vector.load %arg2[%c1_10, %c0_11, %c0_12, %c0_13] : memref<9x4x4x128xf32, #tpu.memory_space<vmem>>, vector<1x4x4x128xf32>
    %31 = vector.shape_cast %30 : vector<1x4x4x128xf32> to vector<4x4x128xf32>
    %32 = vector.shape_cast %29 : vector<4x4x128xf32> to vector<1x4x4x128xf32>
    tpu.vector_store %arg2[%c1_10, %c0_11, %c0_12, %c0_13], %32 {strides = array<i32>} : memref<9x4x4x128xf32, #tpu.memory_space<vmem>>, vector<1x4x4x128xf32>,
    %c2 = arith.constant 2 : index
    %c0_14 = arith.constant 0 : index
    %c0_15 = arith.constant 0 : index
    %c0_16 = arith.constant 0 : index
    %33 = vector.load %arg1[%c2, %c0_14, %c0_15, %c0_16] : memref<8x4x4x128xf32, #tpu.memory_space<vmem>>, vector<1x4x4x128xf32>
    %34 = vector.shape_cast %33 : vector<1x4x4x128xf32> to vector<4x4x128xf32>
    %35 = vector.extract_strided_slice %29 {offsets = [0, 0, 0], sizes = [4, 1, 128], strides = [1, 1, 1]} : vector<4x4x128xf32> to vector<4x1x128xf32>
    %36 = vector.extract_strided_slice %34 {offsets = [0, 0, 0], sizes = [1, 4, 128], strides = [1, 1, 1]} : vector<4x4x128xf32> to vector<1x4x128xf32>
    %37 = vector.broadcast %35 : vector<4x1x128xf32> to vector<4x4x128xf32>
    %38 = vector.broadcast %36 : vector<1x4x128xf32> to vector<4x4x128xf32>
    %39 = arith.mulf %37, %38 : vector<4x4x128xf32>
    %40 = vector.extract_strided_slice %29 {offsets = [0, 1, 0], sizes = [4, 1, 128], strides = [1, 1, 1]} : vector<4x4x128xf32> to vector<4x1x128xf32>
    %41 = vector.extract_strided_slice %34 {offsets = [1, 0, 0], sizes = [1, 4, 128], strides = [1, 1, 1]} : vector<4x4x128xf32> to vector<1x4x128xf32>
    %42 = vector.broadcast %40 : vector<4x1x128xf32> to vector<4x4x128xf32>
    %43 = vector.broadcast %41 : vector<1x4x128xf32> to vector<4x4x128xf32>
    %44 = arith.mulf %42, %43 : vector<4x4x128xf32>
    %45 = arith.addf %39, %44 : vector<4x4x128xf32>
    %46 = vector.extract_strided_slice %29 {offsets = [0, 2, 0], sizes = [4, 1, 128], strides = [1, 1, 1]} : vector<4x4x128xf32> to vector<4x1x128xf32>
    %47 = vector.extract_strided_slice %34 {offsets = [2, 0, 0], sizes = [1, 4, 128], strides = [1, 1, 1]} : vector<4x4x128xf32> to vector<1x4x128xf32>
    %48 = vector.broadcast %46 : vector<4x1x128xf32> to vector<4x4x128xf32>
    %49 = vector.broadcast %47 : vector<1x4x128xf32> to vector<4x4x128xf32>
    %50 = arith.mulf %48, %49 : vector<4x4x128xf32>
    %51 = arith.addf %45, %50 : vector<4x4x128xf32>
    %52 = vector.extract_strided_slice %29 {offsets = [0, 3, 0], sizes = [4, 1, 128], strides = [1, 1, 1]} : vector<4x4x128xf32> to vector<4x1x128xf32>
    %53 = vector.extract_strided_slice %34 {offsets = [3, 0, 0], sizes = [1, 4, 128], strides = [1, 1, 1]} : vector<4x4x128xf32> to vector<1x4x128xf32>
    %54 = vector.broadcast %52 : vector<4x1x128xf32> to vector<4x4x128xf32>
    %55 = vector.broadcast %53 : vector<1x4x128xf32> to vector<4x4x128xf32>
    %56 = arith.mulf %54, %55 : vector<4x4x128xf32>
    %57 = arith.addf %51, %56 : vector<4x4x128xf32>
    %c2_17 = arith.constant 2 : index
    %c0_18 = arith.constant 0 : index
    %c0_19 = arith.constant 0 : index
    %c0_20 = arith.constant 0 : index
    %58 = vector.load %arg2[%c2_17, %c0_18, %c0_19, %c0_20] : memref<9x4x4x128xf32, #tpu.memory_space<vmem>>, vector<1x4x4x128xf32>
    %59 = vector.shape_cast %58 : vector<1x4x4x128xf32> to vector<4x4x128xf32>
    %60 = vector.shape_cast %57 : vector<4x4x128xf32> to vector<1x4x4x128xf32>
    tpu.vector_store %arg2[%c2_17, %c0_18, %c0_19, %c0_20], %60 {strides = array<i32>} : memref<9x4x4x128xf32, #tpu.memory_space<vmem>>, vector<1x4x4x128xf32>,
    %c3 = arith.constant 3 : index
    %c0_21 = arith.constant 0 : index
    %c0_22 = arith.constant 0 : index
    %c0_23 = arith.constant 0 : index
    %61 = vector.load %arg1[%c3, %c0_21, %c0_22, %c0_23] : memref<8x4x4x128xf32, #tpu.memory_space<vmem>>, vector<1x4x4x128xf32>
    %62 = vector.shape_cast %61 : vector<1x4x4x128xf32> to vector<4x4x128xf32>
    %63 = vector.extract_strided_slice %57 {offsets = [0, 0, 0], sizes = [4, 1, 128], strides = [1, 1, 1]} : vector<4x4x128xf32> to vector<4x1x128xf32>
    %64 = vector.extract_strided_slice %62 {offsets = [0, 0, 0], sizes = [1, 4, 128], strides = [1, 1, 1]} : vector<4x4x128xf32> to vector<1x4x128xf32>
    %65 = vector.broadcast %63 : vector<4x1x128xf32> to vector<4x4x128xf32>
    %66 = vector.broadcast %64 : vector<1x4x128xf32> to vector<4x4x128xf32>
    %67 = arith.mulf %65, %66 : vector<4x4x128xf32>
    %68 = vector.extract_strided_slice %57 {offsets = [0, 1, 0], sizes = [4, 1, 128], strides = [1, 1, 1]} : vector<4x4x128xf32> to vector<4x1x128xf32>
    %69 = vector.extract_strided_slice %62 {offsets = [1, 0, 0], sizes = [1, 4, 128], strides = [1, 1, 1]} : vector<4x4x128xf32> to vector<1x4x128xf32>
    %70 = vector.broadcast %68 : vector<4x1x128xf32> to vector<4x4x128xf32>
    %71 = vector.broadcast %69 : vector<1x4x128xf32> to vector<4x4x128xf32>
    %72 = arith.mulf %70, %71 : vector<4x4x128xf32>
    %73 = arith.addf %67, %72 : vector<4x4x128xf32>
    %74 = vector.extract_strided_slice %57 {offsets = [0, 2, 0], sizes = [4, 1, 128], strides = [1, 1, 1]} : vector<4x4x128xf32> to vector<4x1x128xf32>
    %75 = vector.extract_strided_slice %62 {offsets = [2, 0, 0], sizes = [1, 4, 128], strides = [1, 1, 1]} : vector<4x4x128xf32> to vector<1x4x128xf32>
    %76 = vector.broadcast %74 : vector<4x1x128xf32> to vector<4x4x128xf32>
    %77 = vector.broadcast %75 : vector<1x4x128xf32> to vector<4x4x128xf32>
    %78 = arith.mulf %76, %77 : vector<4x4x128xf32>
    %79 = arith.addf %73, %78 : vector<4x4x128xf32>
    %80 = vector.extract_strided_slice %57 {offsets = [0, 3, 0], sizes = [4, 1, 128], strides = [1, 1, 1]} : vector<4x4x128xf32> to vector<4x1x128xf32>
    %81 = vector.extract_strided_slice %62 {offsets = [3, 0, 0], sizes = [1, 4, 128], strides = [1, 1, 1]} : vector<4x4x128xf32> to vector<1x4x128xf32>
    %82 = vector.broadcast %80 : vector<4x1x128xf32> to vector<4x4x128xf32>
    %83 = vector.broadcast %81 : vector<1x4x128xf32> to vector<4x4x128xf32>
    %84 = arith.mulf %82, %83 : vector<4x4x128xf32>
    %85 = arith.addf %79, %84 : vector<4x4x128xf32>
    %c3_24 = arith.constant 3 : index
    %c0_25 = arith.constant 0 : index
    %c0_26 = arith.constant 0 : index
    %c0_27 = arith.constant 0 : index
    %86 = vector.load %arg2[%c3_24, %c0_25, %c0_26, %c0_27] : memref<9x4x4x128xf32, #tpu.memory_space<vmem>>, vector<1x4x4x128xf32>
    %87 = vector.shape_cast %86 : vector<1x4x4x128xf32> to vector<4x4x128xf32>
    %88 = vector.shape_cast %85 : vector<4x4x128xf32> to vector<1x4x4x128xf32>
    tpu.vector_store %arg2[%c3_24, %c0_25, %c0_26, %c0_27], %88 {strides = array<i32>} : memref<9x4x4x128xf32, #tpu.memory_space<vmem>>, vector<1x4x4x128xf32>,
    %c4 = arith.constant 4 : index
    %c0_28 = arith.constant 0 : index
    %c0_29 = arith.constant 0 : index
    %c0_30 = arith.constant 0 : index
    %89 = vector.load %arg1[%c4, %c0_28, %c0_29, %c0_30] : memref<8x4x4x128xf32, #tpu.memory_space<vmem>>, vector<1x4x4x128xf32>
    %90 = vector.shape_cast %89 : vector<1x4x4x128xf32> to vector<4x4x128xf32>
    %91 = vector.extract_strided_slice %85 {offsets = [0, 0, 0], sizes = [4, 1, 128], strides = [1, 1, 1]} : vector<4x4x128xf32> to vector<4x1x128xf32>
    %92 = vector.extract_strided_slice %90 {offsets = [0, 0, 0], sizes = [1, 4, 128], strides = [1, 1, 1]} : vector<4x4x128xf32> to vector<1x4x128xf32>
    %93 = vector.broadcast %91 : vector<4x1x128xf32> to vector<4x4x128xf32>
    %94 = vector.broadcast %92 : vector<1x4x128xf32> to vector<4x4x128xf32>
    %95 = arith.mulf %93, %94 : vector<4x4x128xf32>
    %96 = vector.extract_strided_slice %85 {offsets = [0, 1, 0], sizes = [4, 1, 128], strides = [1, 1, 1]} : vector<4x4x128xf32> to vector<4x1x128xf32>
    %97 = vector.extract_strided_slice %90 {offsets = [1, 0, 0], sizes = [1, 4, 128], strides = [1, 1, 1]} : vector<4x4x128xf32> to vector<1x4x128xf32>
    %98 = vector.broadcast %96 : vector<4x1x128xf32> to vector<4x4x128xf32>
    %99 = vector.broadcast %97 : vector<1x4x128xf32> to vector<4x4x128xf32>
    %100 = arith.mulf %98, %99 : vector<4x4x128xf32>
    %101 = arith.addf %95, %100 : vector<4x4x128xf32>
    %102 = vector.extract_strided_slice %85 {offsets = [0, 2, 0], sizes = [4, 1, 128], strides = [1, 1, 1]} : vector<4x4x128xf32> to vector<4x1x128xf32>
    %103 = vector.extract_strided_slice %90 {offsets = [2, 0, 0], sizes = [1, 4, 128], strides = [1, 1, 1]} : vector<4x4x128xf32> to vector<1x4x128xf32>
    %104 = vector.broadcast %102 : vector<4x1x128xf32> to vector<4x4x128xf32>
    %105 = vector.broadcast %103 : vector<1x4x128xf32> to vector<4x4x128xf32>
    %106 = arith.mulf %104, %105 : vector<4x4x128xf32>
    %107 = arith.addf %101, %106 : vector<4x4x128xf32>
    %108 = vector.extract_strided_slice %85 {offsets = [0, 3, 0], sizes = [4, 1, 128], strides = [1, 1, 1]} : vector<4x4x128xf32> to vector<4x1x128xf32>
    %109 = vector.extract_strided_slice %90 {offsets = [3, 0, 0], sizes = [1, 4, 128], strides = [1, 1, 1]} : vector<4x4x128xf32> to vector<1x4x128xf32>
    %110 = vector.broadcast %108 : vector<4x1x128xf32> to vector<4x4x128xf32>
    %111 = vector.broadcast %109 : vector<1x4x128xf32> to vector<4x4x128xf32>
    %112 = arith.mulf %110, %111 : vector<4x4x128xf32>
    %113 = arith.addf %107, %112 : vector<4x4x128xf32>
    %c4_31 = arith.constant 4 : index
    %c0_32 = arith.constant 0 : index
    %c0_33 = arith.constant 0 : index
    %c0_34 = arith.constant 0 : index
    %114 = vector.load %arg2[%c4_31, %c0_32, %c0_33, %c0_34] : memref<9x4x4x128xf32, #tpu.memory_space<vmem>>, vector<1x4x4x128xf32>
    %115 = vector.shape_cast %114 : vector<1x4x4x128xf32> to vector<4x4x128xf32>
    %116 = vector.shape_cast %113 : vector<4x4x128xf32> to vector<1x4x4x128xf32>
    tpu.vector_store %arg2[%c4_31, %c0_32, %c0_33, %c0_34], %116 {strides = array<i32>} : memref<9x4x4x128xf32, #tpu.memory_space<vmem>>, vector<1x4x4x128xf32>,
    %c5 = arith.constant 5 : index
    %c0_35 = arith.constant 0 : index
    %c0_36 = arith.constant 0 : index
    %c0_37 = arith.constant 0 : index
    %117 = vector.load %arg1[%c5, %c0_35, %c0_36, %c0_37] : memref<8x4x4x128xf32, #tpu.memory_space<vmem>>, vector<1x4x4x128xf32>
    %118 = vector.shape_cast %117 : vector<1x4x4x128xf32> to vector<4x4x128xf32>
    %119 = vector.extract_strided_slice %113 {offsets = [0, 0, 0], sizes = [4, 1, 128], strides = [1, 1, 1]} : vector<4x4x128xf32> to vector<4x1x128xf32>
    %120 = vector.extract_strided_slice %118 {offsets = [0, 0, 0], sizes = [1, 4, 128], strides = [1, 1, 1]} : vector<4x4x128xf32> to vector<1x4x128xf32>
    %121 = vector.broadcast %119 : vector<4x1x128xf32> to vector<4x4x128xf32>
    %122 = vector.broadcast %120 : vector<1x4x128xf32> to vector<4x4x128xf32>
    %123 = arith.mulf %121, %122 : vector<4x4x128xf32>
    %124 = vector.extract_strided_slice %113 {offsets = [0, 1, 0], sizes = [4, 1, 128], strides = [1, 1, 1]} : vector<4x4x128xf32> to vector<4x1x128xf32>
    %125 = vector.extract_strided_slice %118 {offsets = [1, 0, 0], sizes = [1, 4, 128], strides = [1, 1, 1]} : vector<4x4x128xf32> to vector<1x4x128xf32>
    %126 = vector.broadcast %124 : vector<4x1x128xf32> to vector<4x4x128xf32>
    %127 = vector.broadcast %125 : vector<1x4x128xf32> to vector<4x4x128xf32>
    %128 = arith.mulf %126, %127 : vector<4x4x128xf32>
    %129 = arith.addf %123, %128 : vector<4x4x128xf32>
    %130 = vector.extract_strided_slice %113 {offsets = [0, 2, 0], sizes = [4, 1, 128], strides = [1, 1, 1]} : vector<4x4x128xf32> to vector<4x1x128xf32>
    %131 = vector.extract_strided_slice %118 {offsets = [2, 0, 0], sizes = [1, 4, 128], strides = [1, 1, 1]} : vector<4x4x128xf32> to vector<1x4x128xf32>
    %132 = vector.broadcast %130 : vector<4x1x128xf32> to vector<4x4x128xf32>
    %133 = vector.broadcast %131 : vector<1x4x128xf32> to vector<4x4x128xf32>
    %134 = arith.mulf %132, %133 : vector<4x4x128xf32>
    %135 = arith.addf %129, %134 : vector<4x4x128xf32>
    %136 = vector.extract_strided_slice %113 {offsets = [0, 3, 0], sizes = [4, 1, 128], strides = [1, 1, 1]} : vector<4x4x128xf32> to vector<4x1x128xf32>
    %137 = vector.extract_strided_slice %118 {offsets = [3, 0, 0], sizes = [1, 4, 128], strides = [1, 1, 1]} : vector<4x4x128xf32> to vector<1x4x128xf32>
    %138 = vector.broadcast %136 : vector<4x1x128xf32> to vector<4x4x128xf32>
    %139 = vector.broadcast %137 : vector<1x4x128xf32> to vector<4x4x128xf32>
    %140 = arith.mulf %138, %139 : vector<4x4x128xf32>
    %141 = arith.addf %135, %140 : vector<4x4x128xf32>
    %c5_38 = arith.constant 5 : index
    %c0_39 = arith.constant 0 : index
    %c0_40 = arith.constant 0 : index
    %c0_41 = arith.constant 0 : index
    %142 = vector.load %arg2[%c5_38, %c0_39, %c0_40, %c0_41] : memref<9x4x4x128xf32, #tpu.memory_space<vmem>>, vector<1x4x4x128xf32>
    %143 = vector.shape_cast %142 : vector<1x4x4x128xf32> to vector<4x4x128xf32>
    %144 = vector.shape_cast %141 : vector<4x4x128xf32> to vector<1x4x4x128xf32>
    tpu.vector_store %arg2[%c5_38, %c0_39, %c0_40, %c0_41], %144 {strides = array<i32>} : memref<9x4x4x128xf32, #tpu.memory_space<vmem>>, vector<1x4x4x128xf32>,
    %c6 = arith.constant 6 : index
    %c0_42 = arith.constant 0 : index
    %c0_43 = arith.constant 0 : index
    %c0_44 = arith.constant 0 : index
    %145 = vector.load %arg1[%c6, %c0_42, %c0_43, %c0_44] : memref<8x4x4x128xf32, #tpu.memory_space<vmem>>, vector<1x4x4x128xf32>
    %146 = vector.shape_cast %145 : vector<1x4x4x128xf32> to vector<4x4x128xf32>
    %147 = vector.extract_strided_slice %141 {offsets = [0, 0, 0], sizes = [4, 1, 128], strides = [1, 1, 1]} : vector<4x4x128xf32> to vector<4x1x128xf32>
    %148 = vector.extract_strided_slice %146 {offsets = [0, 0, 0], sizes = [1, 4, 128], strides = [1, 1, 1]} : vector<4x4x128xf32> to vector<1x4x128xf32>
    %149 = vector.broadcast %147 : vector<4x1x128xf32> to vector<4x4x128xf32>
    %150 = vector.broadcast %148 : vector<1x4x128xf32> to vector<4x4x128xf32>
    %151 = arith.mulf %149, %150 : vector<4x4x128xf32>
    %152 = vector.extract_strided_slice %141 {offsets = [0, 1, 0], sizes = [4, 1, 128], strides = [1, 1, 1]} : vector<4x4x128xf32> to vector<4x1x128xf32>
    %153 = vector.extract_strided_slice %146 {offsets = [1, 0, 0], sizes = [1, 4, 128], strides = [1, 1, 1]} : vector<4x4x128xf32> to vector<1x4x128xf32>
    %154 = vector.broadcast %152 : vector<4x1x128xf32> to vector<4x4x128xf32>
    %155 = vector.broadcast %153 : vector<1x4x128xf32> to vector<4x4x128xf32>
    %156 = arith.mulf %154, %155 : vector<4x4x128xf32>
    %157 = arith.addf %151, %156 : vector<4x4x128xf32>
    %158 = vector.extract_strided_slice %141 {offsets = [0, 2, 0], sizes = [4, 1, 128], strides = [1, 1, 1]} : vector<4x4x128xf32> to vector<4x1x128xf32>
    %159 = vector.extract_strided_slice %146 {offsets = [2, 0, 0], sizes = [1, 4, 128], strides = [1, 1, 1]} : vector<4x4x128xf32> to vector<1x4x128xf32>
    %160 = vector.broadcast %158 : vector<4x1x128xf32> to vector<4x4x128xf32>
    %161 = vector.broadcast %159 : vector<1x4x128xf32> to vector<4x4x128xf32>
    %162 = arith.mulf %160, %161 : vector<4x4x128xf32>
    %163 = arith.addf %157, %162 : vector<4x4x128xf32>
    %164 = vector.extract_strided_slice %141 {offsets = [0, 3, 0], sizes = [4, 1, 128], strides = [1, 1, 1]} : vector<4x4x128xf32> to vector<4x1x128xf32>
    %165 = vector.extract_strided_slice %146 {offsets = [3, 0, 0], sizes = [1, 4, 128], strides = [1, 1, 1]} : vector<4x4x128xf32> to vector<1x4x128xf32>
    %166 = vector.broadcast %164 : vector<4x1x128xf32> to vector<4x4x128xf32>
    %167 = vector.broadcast %165 : vector<1x4x128xf32> to vector<4x4x128xf32>
    %168 = arith.mulf %166, %167 : vector<4x4x128xf32>
    %169 = arith.addf %163, %168 : vector<4x4x128xf32>
    %c6_45 = arith.constant 6 : index
    %c0_46 = arith.constant 0 : index
    %c0_47 = arith.constant 0 : index
    %c0_48 = arith.constant 0 : index
    %170 = vector.load %arg2[%c6_45, %c0_46, %c0_47, %c0_48] : memref<9x4x4x128xf32, #tpu.memory_space<vmem>>, vector<1x4x4x128xf32>
    %171 = vector.shape_cast %170 : vector<1x4x4x128xf32> to vector<4x4x128xf32>
    %172 = vector.shape_cast %169 : vector<4x4x128xf32> to vector<1x4x4x128xf32>
    tpu.vector_store %arg2[%c6_45, %c0_46, %c0_47, %c0_48], %172 {strides = array<i32>} : memref<9x4x4x128xf32, #tpu.memory_space<vmem>>, vector<1x4x4x128xf32>,
    %c7 = arith.constant 7 : index
    %c0_49 = arith.constant 0 : index
    %c0_50 = arith.constant 0 : index
    %c0_51 = arith.constant 0 : index
    %173 = vector.load %arg1[%c7, %c0_49, %c0_50, %c0_51] : memref<8x4x4x128xf32, #tpu.memory_space<vmem>>, vector<1x4x4x128xf32>
    %174 = vector.shape_cast %173 : vector<1x4x4x128xf32> to vector<4x4x128xf32>
    %175 = vector.extract_strided_slice %169 {offsets = [0, 0, 0], sizes = [4, 1, 128], strides = [1, 1, 1]} : vector<4x4x128xf32> to vector<4x1x128xf32>
    %176 = vector.extract_strided_slice %174 {offsets = [0, 0, 0], sizes = [1, 4, 128], strides = [1, 1, 1]} : vector<4x4x128xf32> to vector<1x4x128xf32>
    %177 = vector.broadcast %175 : vector<4x1x128xf32> to vector<4x4x128xf32>
    %178 = vector.broadcast %176 : vector<1x4x128xf32> to vector<4x4x128xf32>
    %179 = arith.mulf %177, %178 : vector<4x4x128xf32>
    %180 = vector.extract_strided_slice %169 {offsets = [0, 1, 0], sizes = [4, 1, 128], strides = [1, 1, 1]} : vector<4x4x128xf32> to vector<4x1x128xf32>
    %181 = vector.extract_strided_slice %174 {offsets = [1, 0, 0], sizes = [1, 4, 128], strides = [1, 1, 1]} : vector<4x4x128xf32> to vector<1x4x128xf32>
    %182 = vector.broadcast %180 : vector<4x1x128xf32> to vector<4x4x128xf32>
    %183 = vector.broadcast %181 : vector<1x4x128xf32> to vector<4x4x128xf32>
    %184 = arith.mulf %182, %183 : vector<4x4x128xf32>
    %185 = arith.addf %179, %184 : vector<4x4x128xf32>
    %186 = vector.extract_strided_slice %169 {offsets = [0, 2, 0], sizes = [4, 1, 128], strides = [1, 1, 1]} : vector<4x4x128xf32> to vector<4x1x128xf32>
    %187 = vector.extract_strided_slice %174 {offsets = [2, 0, 0], sizes = [1, 4, 128], strides = [1, 1, 1]} : vector<4x4x128xf32> to vector<1x4x128xf32>
    %188 = vector.broadcast %186 : vector<4x1x128xf32> to vector<4x4x128xf32>
    %189 = vector.broadcast %187 : vector<1x4x128xf32> to vector<4x4x128xf32>
    %190 = arith.mulf %188, %189 : vector<4x4x128xf32>
    %191 = arith.addf %185, %190 : vector<4x4x128xf32>
    %192 = vector.extract_strided_slice %169 {offsets = [0, 3, 0], sizes = [4, 1, 128], strides = [1, 1, 1]} : vector<4x4x128xf32> to vector<4x1x128xf32>
    %193 = vector.extract_strided_slice %174 {offsets = [3, 0, 0], sizes = [1, 4, 128], strides = [1, 1, 1]} : vector<4x4x128xf32> to vector<1x4x128xf32>
    %194 = vector.broadcast %192 : vector<4x1x128xf32> to vector<4x4x128xf32>
    %195 = vector.broadcast %193 : vector<1x4x128xf32> to vector<4x4x128xf32>
    %196 = arith.mulf %194, %195 : vector<4x4x128xf32>
    %197 = arith.addf %191, %196 : vector<4x4x128xf32>
    %c7_52 = arith.constant 7 : index
    %c0_53 = arith.constant 0 : index
    %c0_54 = arith.constant 0 : index
    %c0_55 = arith.constant 0 : index
    %198 = vector.load %arg2[%c7_52, %c0_53, %c0_54, %c0_55] : memref<9x4x4x128xf32, #tpu.memory_space<vmem>>, vector<1x4x4x128xf32>
    %199 = vector.shape_cast %198 : vector<1x4x4x128xf32> to vector<4x4x128xf32>
    %200 = vector.shape_cast %197 : vector<4x4x128xf32> to vector<1x4x4x128xf32>
    tpu.vector_store %arg2[%c7_52, %c0_53, %c0_54, %c0_55], %200 {strides = array<i32>} : memref<9x4x4x128xf32, #tpu.memory_space<vmem>>, vector<1x4x4x128xf32>,
    %c8 = arith.constant 8 : index
    %c0_56 = arith.constant 0 : index
    %c0_57 = arith.constant 0 : index
    %c0_58 = arith.constant 0 : index
    %201 = vector.load %arg2[%c8, %c0_56, %c0_57, %c0_58] : memref<9x4x4x128xf32, #tpu.memory_space<vmem>>, vector<1x4x4x128xf32>
    %202 = vector.shape_cast %201 : vector<1x4x4x128xf32> to vector<4x4x128xf32>
    %203 = vector.shape_cast %197 : vector<4x4x128xf32> to vector<1x4x4x128xf32>
    tpu.vector_store %arg2[%c8, %c0_56, %c0_57, %c0_58], %203 {strides = array<i32>} : memref<9x4x4x128xf32, #tpu.memory_space<vmem>>, vector<1x4x4x128xf32>,
    return
  }
  func.func @transform_0(%arg0: i32) -> (i32, i32, i32, i32) {
    %c0_i32 = arith.constant 0 : i32
    %c0_i32_0 = arith.constant 0 : i32
    %c0_i32_1 = arith.constant 0 : i32
    %c0_i32_2 = arith.constant 0 : i32
    return %c0_i32, %c0_i32_0, %c0_i32_1, %arg0 : i32, i32, i32, i32
  }
  func.func @transform_1(%arg0: i32) -> (i32, i32, i32, i32) {
    %c0_i32 = arith.constant 0 : i32
    %c0_i32_0 = arith.constant 0 : i32
    %c0_i32_1 = arith.constant 0 : i32
    %c0_i32_2 = arith.constant 0 : i32
    return %c0_i32, %c0_i32_0, %c0_i32_1, %arg0 : i32, i32, i32, i32
  }
}

</mosaic_0001>

<llo_original>
// kernel: tpu_custom_call.1
$region0: #{tpu_custom_call.1}
  #allocation0 [shape = 'u32[]', space=smem, size = 0x4, offset = 0x4, fixed_abs, tag = 'smem constant byte address 0x4 - core index']
  #allocation1 [shape = 'u32[144,128]{1,0:T(1,128)}', space=vmem, size = 0x12000, scoped, tag = 'internal scratch']
  %s0 = inlined_call_operand.hbm [shape: f32[8,4,4,128], index: 0, kind: input, shape index: {}]
  %s1 = inlined_call_operand.hbm [shape: f32[9,4,4,128], index: 1, kind: output, shape index: {}]
  %s2 = sld [smem:[#allocation0]]
  $region18: #{tpu_custom_call.1} parent=0
    _
  %s4 = ssub.s32 1, %s2
  %s5 = scalar_select 0, %s4, %s2
  $region1: #{tpu_custom_call.1} parent=0
    #allocation2 [shape = 'u8[65536]{0}', space=vmem, size = 0x10000, scoped, tag = 'input window, operand 0, single buffered']
    #allocation3 [shape = 's32[1]{0}', space=sflag, size = 0x4, scoped, tag = 'scoped memory for tpu_custom_call.1']
    #allocation4 [shape = 's32[1]{0}', space=sflag, size = 0x4, scoped, tag = 'scoped memory for tpu_custom_call.1']
    #allocation5 [shape = 'u8[73728]{0}', space=vmem, size = 0x12000, scoped, tag = 'output window, operand 0, single buffered']
    %6 = vsyncpa [#allocation3], 0
    %7 = vsyncpa [#allocation4], 0
    // Predicated region
    $region2: #{tpu_custom_call.1} parent=1 // pred_check
      _
    $region3: #{tpu_custom_call.1} parent=1 // pred_check_branch
      %9 = sbr.rel (0) target = $region5
    $region4: #{tpu_custom_call.1} parent=1 // pred_region
      %s11 = ssub.s32 2048, 2048
      %12 = vsyncadd [#allocation3], %s11
      %s13 = sshll.u32 [#allocation2], 4
      %s14 = int_to_ptr.vmem [resolvable:$true] %s13
      %19 = dma.hbm_to_vmem [thread:$0]  %s0, 2048, %s14, [#allocation3], 64, 64, 4
    $region5: #{tpu_custom_call.1} parent=1 // pred_fallthru
      _
    // Predicated region
    $region6: #{tpu_custom_call.1} parent=1 // pred_check
      _
    $region7: #{tpu_custom_call.1} parent=1 // pred_check_branch
      %21 = sbr.rel (0) target = $region9
    $region8: #{tpu_custom_call.1} parent=1 // pred_region
      %22 = dma.done [#allocation3], 2048
    $region9: #{tpu_custom_call.1} parent=1 // pred_fallthru
      _
    %v23 = vld [vmem:[#allocation2] sm:$0xf]
    %v24 = vld [vmem:[#allocation2 + $0x4] sm:$0xf]
    %v25 = vld [vmem:[#allocation2 + $0x8] sm:$0xf]
    %v26 = vld [vmem:[#allocation2 + $0xc] sm:$0xf]
    %27 = vst [vmem:[#allocation5] sm:$0xf] %v23
    %28 = vst [vmem:[#allocation5 + $0x4] sm:$0xf] %v24
    %29 = vst [vmem:[#allocation5 + $0x8] sm:$0xf] %v25
    %30 = vst [vmem:[#allocation5 + $0xc] sm:$0xf] %v26
    %s31 = scalar_lea.vmem [#allocation2], 16
    %v32 = vld [vmem:[%s31] sm:$0xf]
    %v33 = vld [vmem:[%s31 + $0x4] sm:$0xf]
    %v34 = vld [vmem:[%s31 + $0x8] sm:$0xf]
    %v35 = vld [vmem:[%s31 + $0xc] sm:$0xf]
    %v36 = vlaneseq
    %v37 = vshrl.u32 %v36, 7
    %v38 = vsub.s32 0, %v37
    %v39 = vrot.slane %v23, %v38
    %v40 = vlaneseq
    %v41 = vshrl.u32 %v40, 7
    %v42 = vsub.s32 0, %v41
    %v43 = vrot.slane %v24, %v42
    %v44 = vlaneseq
    %v45 = vshrl.u32 %v44, 7
    %v46 = vsub.s32 0, %v45
    %v47 = vrot.slane %v25, %v46
    %v48 = vlaneseq
    %v49 = vshrl.u32 %v48, 7
    %v50 = vsub.s32 0, %v49
    %v51 = vrot.slane %v26, %v50
    %v52 = vmul.f32 %v39, %v32
    %v53 = vmul.f32 %v43, %v32
    %v54 = vmul.f32 %v47, %v32
    %v55 = vmul.f32 %v51, %v32
    %v56 = vlaneseq
    %v57 = vshrl.u32 %v56, 7
    %v58 = vsub.s32 1, %v57
    %v59 = vrot.slane %v23, %v58
    %v60 = vlaneseq
    %v61 = vshrl.u32 %v60, 7
    %v62 = vsub.s32 1, %v61
    %v63 = vrot.slane %v24, %v62
    %v64 = vlaneseq
    %v65 = vshrl.u32 %v64, 7
    %v66 = vsub.s32 1, %v65
    %v67 = vrot.slane %v25, %v66
    %v68 = vlaneseq
    %v69 = vshrl.u32 %v68, 7
    %v70 = vsub.s32 1, %v69
    %v71 = vrot.slane %v26, %v70
    %v72 = vmul.f32 %v59, %v33
    %v73 = vmul.f32 %v63, %v33
    %v74 = vmul.f32 %v67, %v33
    %v75 = vmul.f32 %v71, %v33
    %v76 = vadd.f32 %v52, %v72
    %v77 = vadd.f32 %v53, %v73
    %v78 = vadd.f32 %v54, %v74
    %v79 = vadd.f32 %v55, %v75
    %v80 = vlaneseq
    %v81 = vshrl.u32 %v80, 7
    %v82 = vsub.s32 2, %v81
    %v83 = vrot.slane %v23, %v82
    %v84 = vlaneseq
    %v85 = vshrl.u32 %v84, 7
    %v86 = vsub.s32 2, %v85
    %v87 = vrot.slane %v24, %v86
    %v88 = vlaneseq
    %v89 = vshrl.u32 %v88, 7
    %v90 = vsub.s32 2, %v89
    %v91 = vrot.slane %v25, %v90
    %v92 = vlaneseq
    %v93 = vshrl.u32 %v92, 7
    %v94 = vsub.s32 2, %v93
    %v95 = vrot.slane %v26, %v94
    %v96 = vmul.f32 %v83, %v34
    %v97 = vmul.f32 %v87, %v34
    %v98 = vmul.f32 %v91, %v34
    %v99 = vmul.f32 %v95, %v34
    %v100 = vadd.f32 %v76, %v96
    %v101 = vadd.f32 %v77, %v97
    %v102 = vadd.f32 %v78, %v98
    %v103 = vadd.f32 %v79, %v99
    %v104 = vlaneseq
    %v105 = vshrl.u32 %v104, 7
    %v106 = vsub.s32 3, %v105
    %v107 = vrot.slane %v23, %v106
    %v108 = vlaneseq
    %v109 = vshrl.u32 %v108, 7
    %v110 = vsub.s32 3, %v109
    %v111 = vrot.slane %v24, %v110
    %v112 = vlaneseq
    %v113 = vshrl.u32 %v112, 7
    %v114 = vsub.s32 3, %v113
    %v115 = vrot.slane %v25, %v114
    %v116 = vlaneseq
    %v117 = vshrl.u32 %v116, 7
    %v118 = vsub.s32 3, %v117
    %v119 = vrot.slane %v26, %v118
    %v120 = vmul.f32 %v107, %v35
    %v121 = vmul.f32 %v111, %v35
    %v122 = vmul.f32 %v115, %v35
    %v123 = vmul.f32 %v119, %v35
    %v124 = vadd.f32 %v100, %v120
    %v125 = vadd.f32 %v101, %v121
    %v126 = vadd.f32 %v102, %v122
    %v127 = vadd.f32 %v103, %v123
    %s128 = scalar_lea.vmem [#allocation5], 16
    %129 = vst [vmem:[%s128] sm:$0xf] %v124
    %130 = vst [vmem:[%s128 + $0x4] sm:$0xf] %v125
    %131 = vst [vmem:[%s128 + $0x8] sm:$0xf] %v126
    %132 = vst [vmem:[%s128 + $0xc] sm:$0xf] %v127
    %s133 = scalar_lea.vmem [#allocation2], 32
    %v134 = vld [vmem:[%s133] sm:$0xf]
    %v135 = vld [vmem:[%s133 + $0x4] sm:$0xf]
    %v136 = vld [vmem:[%s133 + $0x8] sm:$0xf]
    %v137 = vld [vmem:[%s133 + $0xc] sm:$0xf]
    %v138 = vlaneseq
    %v139 = vshrl.u32 %v138, 7
    %v140 = vsub.s32 0, %v139
    %v141 = vrot.slane %v124, %v140
    %v142 = vlaneseq
    %v143 = vshrl.u32 %v142, 7
    %v144 = vsub.s32 0, %v143
    %v145 = vrot.slane %v125, %v144
    %v146 = vlaneseq
    %v147 = vshrl.u32 %v146, 7
    %v148 = vsub.s32 0, %v147
    %v149 = vrot.slane %v126, %v148
    %v150 = vlaneseq
    %v151 = vshrl.u32 %v150, 7
    %v152 = vsub.s32 0, %v151
    %v153 = vrot.slane %v127, %v152
    %v154 = vmul.f32 %v141, %v134
    %v155 = vmul.f32 %v145, %v134
    %v156 = vmul.f32 %v149, %v134
    %v157 = vmul.f32 %v153, %v134
    %v158 = vlaneseq
    %v159 = vshrl.u32 %v158, 7
    %v160 = vsub.s32 1, %v159
    %v161 = vrot.slane %v124, %v160
    %v162 = vlaneseq
    %v163 = vshrl.u32 %v162, 7
    %v164 = vsub.s32 1, %v163
    %v165 = vrot.slane %v125, %v164
    %v166 = vlaneseq
    %v167 = vshrl.u32 %v166, 7
    %v168 = vsub.s32 1, %v167
    %v169 = vrot.slane %v126, %v168
    %v170 = vlaneseq
    %v171 = vshrl.u32 %v170, 7
    %v172 = vsub.s32 1, %v171
    %v173 = vrot.slane %v127, %v172
    %v174 = vmul.f32 %v161, %v135
    %v175 = vmul.f32 %v165, %v135
    %v176 = vmul.f32 %v169, %v135
    %v177 = vmul.f32 %v173, %v135
    %v178 = vadd.f32 %v154, %v174
    %v179 = vadd.f32 %v155, %v175
    %v180 = vadd.f32 %v156, %v176
    %v181 = vadd.f32 %v157, %v177
    %v182 = vlaneseq
    %v183 = vshrl.u32 %v182, 7
    %v184 = vsub.s32 2, %v183
    %v185 = vrot.slane %v124, %v184
    %v186 = vlaneseq
    %v187 = vshrl.u32 %v186, 7
    %v188 = vsub.s32 2, %v187
    %v189 = vrot.slane %v125, %v188
    %v190 = vlaneseq
    %v191 = vshrl.u32 %v190, 7
    %v192 = vsub.s32 2, %v191
    %v193 = vrot.slane %v126, %v192
    %v194 = vlaneseq
    %v195 = vshrl.u32 %v194, 7
    %v196 = vsub.s32 2, %v195
    %v197 = vrot.slane %v127, %v196
    %v198 = vmul.f32 %v185, %v136
    %v199 = vmul.f32 %v189, %v136
    %v200 = vmul.f32 %v193, %v136
    %v201 = vmul.f32 %v197, %v136
    %v202 = vadd.f32 %v178, %v198
    %v203 = vadd.f32 %v179, %v199
    %v204 = vadd.f32 %v180, %v200
    %v205 = vadd.f32 %v181, %v201
    %v206 = vlaneseq
    %v207 = vshrl.u32 %v206, 7
    %v208 = vsub.s32 3, %v207
    %v209 = vrot.slane %v124, %v208
    %v210 = vlaneseq
    %v211 = vshrl.u32 %v210, 7
    %v212 = vsub.s32 3, %v211
    %v213 = vrot.slane %v125, %v212
    %v214 = vlaneseq
    %v215 = vshrl.u32 %v214, 7
    %v216 = vsub.s32 3, %v215
    %v217 = vrot.slane %v126, %v216
    %v218 = vlaneseq
    %v219 = vshrl.u32 %v218, 7
    %v220 = vsub.s32 3, %v219
    %v221 = vrot.slane %v127, %v220
    %v222 = vmul.f32 %v209, %v137
    %v223 = vmul.f32 %v213, %v137
    %v224 = vmul.f32 %v217, %v137
    %v225 = vmul.f32 %v221, %v137
    %v226 = vadd.f32 %v202, %v222
    %v227 = vadd.f32 %v203, %v223
    %v228 = vadd.f32 %v204, %v224
    %v229 = vadd.f32 %v205, %v225
    %s230 = scalar_lea.vmem [#allocation5], 32
    %231 = vst [vmem:[%s230] sm:$0xf] %v226
    %232 = vst [vmem:[%s230 + $0x4] sm:$0xf] %v227
    %233 = vst [vmem:[%s230 + $0x8] sm:$0xf] %v228
    %234 = vst [vmem:[%s230 + $0xc] sm:$0xf] %v229
    %s235 = scalar_lea.vmem [#allocation2], 48
    %v236 = vld [vmem:[%s235] sm:$0xf]
    %v237 = vld [vmem:[%s235 + $0x4] sm:$0xf]
    %v238 = vld [vmem:[%s235 + $0x8] sm:$0xf]
    %v239 = vld [vmem:[%s235 + $0xc] sm:$0xf]
    %v240 = vlaneseq
    %v241 = vshrl.u32 %v240, 7
    %v242 = vsub.s32 0, %v241
    %v243 = vrot.slane %v226, %v242
    %v244 = vlaneseq
    %v245 = vshrl.u32 %v244, 7
    %v246 = vsub.s32 0, %v245
    %v247 = vrot.slane %v227, %v246
    %v248 = vlaneseq
    %v249 = vshrl.u32 %v248, 7
    %v250 = vsub.s32 0, %v249
    %v251 = vrot.slane %v228, %v250
    %v252 = vlaneseq
    %v253 = vshrl.u32 %v252, 7
    %v254 = vsub.s32 0, %v253
    %v255 = vrot.slane %v229, %v254
    %v256 = vmul.f32 %v243, %v236
    %v257 = vmul.f32 %v247, %v236
    %v258 = vmul.f32 %v251, %v236
    %v259 = vmul.f32 %v255, %v236
    %v260 = vlaneseq
    %v261 = vshrl.u32 %v260, 7
    %v262 = vsub.s32 1, %v261
    %v263 = vrot.slane %v226, %v262
    %v264 = vlaneseq
    %v265 = vshrl.u32 %v264, 7
    %v266 = vsub.s32 1, %v265
    %v267 = vrot.slane %v227, %v266
    %v268 = vlaneseq
    %v269 = vshrl.u32 %v268, 7
    %v270 = vsub.s32 1, %v269
    %v271 = vrot.slane %v228, %v270
    %v272 = vlaneseq
    %v273 = vshrl.u32 %v272, 7
    %v274 = vsub.s32 1, %v273
    %v275 = vrot.slane %v229, %v274
    %v276 = vmul.f32 %v263, %v237
    %v277 = vmul.f32 %v267, %v237
    %v278 = vmul.f32 %v271, %v237
    %v279 = vmul.f32 %v275, %v237
    %v280 = vadd.f32 %v256, %v276
    %v281 = vadd.f32 %v257, %v277
    %v282 = vadd.f32 %v258, %v278
    %v283 = vadd.f32 %v259, %v279
    %v284 = vlaneseq
    %v285 = vshrl.u32 %v284, 7
    %v286 = vsub.s32 2, %v285
    %v287 = vrot.slane %v226, %v286
    %v288 = vlaneseq
    %v289 = vshrl.u32 %v288, 7
    %v290 = vsub.s32 2, %v289
    %v291 = vrot.slane %v227, %v290
    %v292 = vlaneseq
    %v293 = vshrl.u32 %v292, 7
    %v294 = vsub.s32 2, %v293
    %v295 = vrot.slane %v228, %v294
    %v296 = vlaneseq
    %v297 = vshrl.u32 %v296, 7
    %v298 = vsub.s32 2, %v297
    %v299 = vrot.slane %v229, %v298
    %v300 = vmul.f32 %v287, %v238
    %v301 = vmul.f32 %v291, %v238
    %v302 = vmul.f32 %v295, %v238
    %v303 = vmul.f32 %v299, %v238
    %v304 = vadd.f32 %v280, %v300
    %v305 = vadd.f32 %v281, %v301
    %v306 = vadd.f32 %v282, %v302
    %v307 = vadd.f32 %v283, %v303
    %v308 = vlaneseq
    %v309 = vshrl.u32 %v308, 7
    %v310 = vsub.s32 3, %v309
    %v311 = vrot.slane %v226, %v310
    %v312 = vlaneseq
    %v313 = vshrl.u32 %v312, 7
    %v314 = vsub.s32 3, %v313
    %v315 = vrot.slane %v227, %v314
    %v316 = vlaneseq
    %v317 = vshrl.u32 %v316, 7
    %v318 = vsub.s32 3, %v317
    %v319 = vrot.slane %v228, %v318
    %v320 = vlaneseq
    %v321 = vshrl.u32 %v320, 7
    %v322 = vsub.s32 3, %v321
    %v323 = vrot.slane %v229, %v322
    %v324 = vmul.f32 %v311, %v239
    %v325 = vmul.f32 %v315, %v239
    %v326 = vmul.f32 %v319, %v239
    %v327 = vmul.f32 %v323, %v239
    %v328 = vadd.f32 %v304, %v324
    %v329 = vadd.f32 %v305, %v325
    %v330 = vadd.f32 %v306, %v326
    %v331 = vadd.f32 %v307, %v327
    %s332 = scalar_lea.vmem [#allocation5], 48
    %333 = vst [vmem:[%s332] sm:$0xf] %v328
    %334 = vst [vmem:[%s332 + $0x4] sm:$0xf] %v329
    %335 = vst [vmem:[%s332 + $0x8] sm:$0xf] %v330
    %336 = vst [vmem:[%s332 + $0xc] sm:$0xf] %v331
    %s337 = scalar_lea.vmem [#allocation2], 64
    %v338 = vld [vmem:[%s337] sm:$0xf]
    %v339 = vld [vmem:[%s337 + $0x4] sm:$0xf]
    %v340 = vld [vmem:[%s337 + $0x8] sm:$0xf]
    %v341 = vld [vmem:[%s337 + $0xc] sm:$0xf]
    %v342 = vlaneseq
    %v343 = vshrl.u32 %v342, 7
    %v344 = vsub.s32 0, %v343
    %v345 = vrot.slane %v328, %v344
    %v346 = vlaneseq
    %v347 = vshrl.u32 %v346, 7
    %v348 = vsub.s32 0, %v347
    %v349 = vrot.slane %v329, %v348
    %v350 = vlaneseq
    %v351 = vshrl.u32 %v350, 7
    %v352 = vsub.s32 0, %v351
    %v353 = vrot.slane %v330, %v352
    %v354 = vlaneseq
    %v355 = vshrl.u32 %v354, 7
    %v356 = vsub.s32 0, %v355
    %v357 = vrot.slane %v331, %v356
    %v358 = vmul.f32 %v345, %v338
    %v359 = vmul.f32 %v349, %v338
    %v360 = vmul.f32 %v353, %v338
    %v361 = vmul.f32 %v357, %v338
    %v362 = vlaneseq
    %v363 = vshrl.u32 %v362, 7
    %v364 = vsub.s32 1, %v363
    %v365 = vrot.slane %v328, %v364
    %v366 = vlaneseq
    %v367 = vshrl.u32 %v366, 7
    %v368 = vsub.s32 1, %v367
    %v369 = vrot.slane %v329, %v368
    %v370 = vlaneseq
    %v371 = vshrl.u32 %v370, 7
    %v372 = vsub.s32 1, %v371
    %v373 = vrot.slane %v330, %v372
    %v374 = vlaneseq
    %v375 = vshrl.u32 %v374, 7
    %v376 = vsub.s32 1, %v375
    %v377 = vrot.slane %v331, %v376
    %v378 = vmul.f32 %v365, %v339
    %v379 = vmul.f32 %v369, %v339
    %v380 = vmul.f32 %v373, %v339
    %v381 = vmul.f32 %v377, %v339
    %v382 = vadd.f32 %v358, %v378
    %v383 = vadd.f32 %v359, %v379
    %v384 = vadd.f32 %v360, %v380
    %v385 = vadd.f32 %v361, %v381
    %v386 = vlaneseq
    %v387 = vshrl.u32 %v386, 7
    %v388 = vsub.s32 2, %v387
    %v389 = vrot.slane %v328, %v388
    %v390 = vlaneseq
    %v391 = vshrl.u32 %v390, 7
    %v392 = vsub.s32 2, %v391
    %v393 = vrot.slane %v329, %v392
    %v394 = vlaneseq
    %v395 = vshrl.u32 %v394, 7
    %v396 = vsub.s32 2, %v395
    %v397 = vrot.slane %v330, %v396
    %v398 = vlaneseq
    %v399 = vshrl.u32 %v398, 7
    %v400 = vsub.s32 2, %v399
    %v401 = vrot.slane %v331, %v400
    %v402 = vmul.f32 %v389, %v340
    %v403 = vmul.f32 %v393, %v340
    %v404 = vmul.f32 %v397, %v340
    %v405 = vmul.f32 %v401, %v340
    %v406 = vadd.f32 %v382, %v402
    %v407 = vadd.f32 %v383, %v403
    %v408 = vadd.f32 %v384, %v404
    %v409 = vadd.f32 %v385, %v405
    %v410 = vlaneseq
    %v411 = vshrl.u32 %v410, 7
    %v412 = vsub.s32 3, %v411
    %v413 = vrot.slane %v328, %v412
    %v414 = vlaneseq
    %v415 = vshrl.u32 %v414, 7
    %v416 = vsub.s32 3, %v415
    %v417 = vrot.slane %v329, %v416
    %v418 = vlaneseq
    %v419 = vshrl.u32 %v418, 7
    %v420 = vsub.s32 3, %v419
    %v421 = vrot.slane %v330, %v420
    %v422 = vlaneseq
    %v423 = vshrl.u32 %v422, 7
    %v424 = vsub.s32 3, %v423
    %v425 = vrot.slane %v331, %v424
    %v426 = vmul.f32 %v413, %v341
    %v427 = vmul.f32 %v417, %v341
    %v428 = vmul.f32 %v421, %v341
    %v429 = vmul.f32 %v425, %v341
    %v430 = vadd.f32 %v406, %v426
    %v431 = vadd.f32 %v407, %v427
    %v432 = vadd.f32 %v408, %v428
    %v433 = vadd.f32 %v409, %v429
    %s434 = scalar_lea.vmem [#allocation5], 64
    %435 = vst [vmem:[%s434] sm:$0xf] %v430
    %436 = vst [vmem:[%s434 + $0x4] sm:$0xf] %v431
    %437 = vst [vmem:[%s434 + $0x8] sm:$0xf] %v432
    %438 = vst [vmem:[%s434 + $0xc] sm:$0xf] %v433
    %s439 = scalar_lea.vmem [#allocation2], 80
    %v440 = vld [vmem:[%s439] sm:$0xf]
    %v441 = vld [vmem:[%s439 + $0x4] sm:$0xf]
    %v442 = vld [vmem:[%s439 + $0x8] sm:$0xf]
    %v443 = vld [vmem:[%s439 + $0xc] sm:$0xf]
    %v444 = vlaneseq
    %v445 = vshrl.u32 %v444, 7
    %v446 = vsub.s32 0, %v445
    %v447 = vrot.slane %v430, %v446
    %v448 = vlaneseq
    %v449 = vshrl.u32 %v448, 7
    %v450 = vsub.s32 0, %v449
    %v451 = vrot.slane %v431, %v450
    %v452 = vlaneseq
    %v453 = vshrl.u32 %v452, 7
    %v454 = vsub.s32 0, %v453
    %v455 = vrot.slane %v432, %v454
    %v456 = vlaneseq
    %v457 = vshrl.u32 %v456, 7
    %v458 = vsub.s32 0, %v457
    %v459 = vrot.slane %v433, %v458
    %v460 = vmul.f32 %v447, %v440
    %v461 = vmul.f32 %v451, %v440
    %v462 = vmul.f32 %v455, %v440
    %v463 = vmul.f32 %v459, %v440
    %v464 = vlaneseq
    %v465 = vshrl.u32 %v464, 7
    %v466 = vsub.s32 1, %v465
    %v467 = vrot.slane %v430, %v466
    %v468 = vlaneseq
    %v469 = vshrl.u32 %v468, 7
    %v470 = vsub.s32 1, %v469
    %v471 = vrot.slane %v431, %v470
    %v472 = vlaneseq
    %v473 = vshrl.u32 %v472, 7
    %v474 = vsub.s32 1, %v473
    %v475 = vrot.slane %v432, %v474
    %v476 = vlaneseq
    %v477 = vshrl.u32 %v476, 7
    %v478 = vsub.s32 1, %v477
    %v479 = vrot.slane %v433, %v478
    %v480 = vmul.f32 %v467, %v441
    %v481 = vmul.f32 %v471, %v441
    %v482 = vmul.f32 %v475, %v441
    %v483 = vmul.f32 %v479, %v441
    %v484 = vadd.f32 %v460, %v480
    %v485 = vadd.f32 %v461, %v481
    %v486 = vadd.f32 %v462, %v482
    %v487 = vadd.f32 %v463, %v483
    %v488 = vlaneseq
    %v489 = vshrl.u32 %v488, 7
    %v490 = vsub.s32 2, %v489
    %v491 = vrot.slane %v430, %v490
    %v492 = vlaneseq
    %v493 = vshrl.u32 %v492, 7
    %v494 = vsub.s32 2, %v493
    %v495 = vrot.slane %v431, %v494
    %v496 = vlaneseq
    %v497 = vshrl.u32 %v496, 7
    %v498 = vsub.s32 2, %v497
    %v499 = vrot.slane %v432, %v498
    %v500 = vlaneseq
    %v501 = vshrl.u32 %v500, 7
    %v502 = vsub.s32 2, %v501
    %v503 = vrot.slane %v433, %v502
    %v504 = vmul.f32 %v491, %v442
    %v505 = vmul.f32 %v495, %v442
    %v506 = vmul.f32 %v499, %v442
    %v507 = vmul.f32 %v503, %v442
    %v508 = vadd.f32 %v484, %v504
    %v509 = vadd.f32 %v485, %v505
    %v510 = vadd.f32 %v486, %v506
    %v511 = vadd.f32 %v487, %v507
    %v512 = vlaneseq
    %v513 = vshrl.u32 %v512, 7
    %v514 = vsub.s32 3, %v513
    %v515 = vrot.slane %v430, %v514
    %v516 = vlaneseq
    %v517 = vshrl.u32 %v516, 7
    %v518 = vsub.s32 3, %v517
    %v519 = vrot.slane %v431, %v518
    %v520 = vlaneseq
    %v521 = vshrl.u32 %v520, 7
    %v522 = vsub.s32 3, %v521
    %v523 = vrot.slane %v432, %v522
    %v524 = vlaneseq
    %v525 = vshrl.u32 %v524, 7
    %v526 = vsub.s32 3, %v525
    %v527 = vrot.slane %v433, %v526
    %v528 = vmul.f32 %v515, %v443
    %v529 = vmul.f32 %v519, %v443
    %v530 = vmul.f32 %v523, %v443
    %v531 = vmul.f32 %v527, %v443
    %v532 = vadd.f32 %v508, %v528
    %v533 = vadd.f32 %v509, %v529
    %v534 = vadd.f32 %v510, %v530
    %v535 = vadd.f32 %v511, %v531
    %s536 = scalar_lea.vmem [#allocation5], 80
    %537 = vst [vmem:[%s536] sm:$0xf] %v532
    %538 = vst [vmem:[%s536 + $0x4] sm:$0xf] %v533
    %539 = vst [vmem:[%s536 + $0x8] sm:$0xf] %v534
    %540 = vst [vmem:[%s536 + $0xc] sm:$0xf] %v535
    %s541 = scalar_lea.vmem [#allocation2], 96
    %v542 = vld [vmem:[%s541] sm:$0xf]
    %v543 = vld [vmem:[%s541 + $0x4] sm:$0xf]
    %v544 = vld [vmem:[%s541 + $0x8] sm:$0xf]
    %v545 = vld [vmem:[%s541 + $0xc] sm:$0xf]
    %v546 = vlaneseq
    %v547 = vshrl.u32 %v546, 7
    %v548 = vsub.s32 0, %v547
    %v549 = vrot.slane %v532, %v548
    %v550 = vlaneseq
    %v551 = vshrl.u32 %v550, 7
    %v552 = vsub.s32 0, %v551
    %v553 = vrot.slane %v533, %v552
    %v554 = vlaneseq
    %v555 = vshrl.u32 %v554, 7
    %v556 = vsub.s32 0, %v555
    %v557 = vrot.slane %v534, %v556
    %v558 = vlaneseq
    %v559 = vshrl.u32 %v558, 7
    %v560 = vsub.s32 0, %v559
    %v561 = vrot.slane %v535, %v560
    %v562 = vmul.f32 %v549, %v542
    %v563 = vmul.f32 %v553, %v542
    %v564 = vmul.f32 %v557, %v542
    %v565 = vmul.f32 %v561, %v542
    %v566 = vlaneseq
    %v567 = vshrl.u32 %v566, 7
    %v568 = vsub.s32 1, %v567
    %v569 = vrot.slane %v532, %v568
    %v570 = vlaneseq
    %v571 = vshrl.u32 %v570, 7
    %v572 = vsub.s32 1, %v571
    %v573 = vrot.slane %v533, %v572
    %v574 = vlaneseq
    %v575 = vshrl.u32 %v574, 7
    %v576 = vsub.s32 1, %v575
    %v577 = vrot.slane %v534, %v576
    %v578 = vlaneseq
    %v579 = vshrl.u32 %v578, 7
    %v580 = vsub.s32 1, %v579
    %v581 = vrot.slane %v535, %v580
    %v582 = vmul.f32 %v569, %v543
    %v583 = vmul.f32 %v573, %v543
    %v584 = vmul.f32 %v577, %v543
    %v585 = vmul.f32 %v581, %v543
    %v586 = vadd.f32 %v562, %v582
    %v587 = vadd.f32 %v563, %v583
    %v588 = vadd.f32 %v564, %v584
    %v589 = vadd.f32 %v565, %v585
    %v590 = vlaneseq
    %v591 = vshrl.u32 %v590, 7
    %v592 = vsub.s32 2, %v591
    %v593 = vrot.slane %v532, %v592
    %v594 = vlaneseq
    %v595 = vshrl.u32 %v594, 7
    %v596 = vsub.s32 2, %v595
    %v597 = vrot.slane %v533, %v596
    %v598 = vlaneseq
    %v599 = vshrl.u32 %v598, 7
    %v600 = vsub.s32 2, %v599
    %v601 = vrot.slane %v534, %v600
    %v602 = vlaneseq
    %v603 = vshrl.u32 %v602, 7
    %v604 = vsub.s32 2, %v603
    %v605 = vrot.slane %v535, %v604
    %v606 = vmul.f32 %v593, %v544
    %v607 = vmul.f32 %v597, %v544
    %v608 = vmul.f32 %v601, %v544
    %v609 = vmul.f32 %v605, %v544
    %v610 = vadd.f32 %v586, %v606
    %v611 = vadd.f32 %v587, %v607
    %v612 = vadd.f32 %v588, %v608
    %v613 = vadd.f32 %v589, %v609
    %v614 = vlaneseq
    %v615 = vshrl.u32 %v614, 7
    %v616 = vsub.s32 3, %v615
    %v617 = vrot.slane %v532, %v616
    %v618 = vlaneseq
    %v619 = vshrl.u32 %v618, 7
    %v620 = vsub.s32 3, %v619
    %v621 = vrot.slane %v533, %v620
    %v622 = vlaneseq
    %v623 = vshrl.u32 %v622, 7
    %v624 = vsub.s32 3, %v623
    %v625 = vrot.slane %v534, %v624
    %v626 = vlaneseq
    %v627 = vshrl.u32 %v626, 7
    %v628 = vsub.s32 3, %v627
    %v629 = vrot.slane %v535, %v628
    %v630 = vmul.f32 %v617, %v545
    %v631 = vmul.f32 %v621, %v545
    %v632 = vmul.f32 %v625, %v545
    %v633 = vmul.f32 %v629, %v545
    %v634 = vadd.f32 %v610, %v630
    %v635 = vadd.f32 %v611, %v631
    %v636 = vadd.f32 %v612, %v632
    %v637 = vadd.f32 %v613, %v633
    %s638 = scalar_lea.vmem [#allocation5], 96
    %639 = vst [vmem:[%s638] sm:$0xf] %v634
    %640 = vst [vmem:[%s638 + $0x4] sm:$0xf] %v635
    %641 = vst [vmem:[%s638 + $0x8] sm:$0xf] %v636
    %642 = vst [vmem:[%s638 + $0xc] sm:$0xf] %v637
    %s643 = scalar_lea.vmem [#allocation2], 112
    %v644 = vld [vmem:[%s643] sm:$0xf]
    %v645 = vld [vmem:[%s643 + $0x4] sm:$0xf]
    %v646 = vld [vmem:[%s643 + $0x8] sm:$0xf]
    %v647 = vld [vmem:[%s643 + $0xc] sm:$0xf]
    %v648 = vlaneseq
    %v649 = vshrl.u32 %v648, 7
    %v650 = vsub.s32 0, %v649
    %v651 = vrot.slane %v634, %v650
    %v652 = vlaneseq
    %v653 = vshrl.u32 %v652, 7
    %v654 = vsub.s32 0, %v653
    %v655 = vrot.slane %v635, %v654
    %v656 = vlaneseq
    %v657 = vshrl.u32 %v656, 7
    %v658 = vsub.s32 0, %v657
    %v659 = vrot.slane %v636, %v658
    %v660 = vlaneseq
    %v661 = vshrl.u32 %v660, 7
    %v662 = vsub.s32 0, %v661
    %v663 = vrot.slane %v637, %v662
    %v664 = vmul.f32 %v651, %v644
    %v665 = vmul.f32 %v655, %v644
    %v666 = vmul.f32 %v659, %v644
    %v667 = vmul.f32 %v663, %v644
    %v668 = vlaneseq
    %v669 = vshrl.u32 %v668, 7
    %v670 = vsub.s32 1, %v669
    %v671 = vrot.slane %v634, %v670
    %v672 = vlaneseq
    %v673 = vshrl.u32 %v672, 7
    %v674 = vsub.s32 1, %v673
    %v675 = vrot.slane %v635, %v674
    %v676 = vlaneseq
    %v677 = vshrl.u32 %v676, 7
    %v678 = vsub.s32 1, %v677
    %v679 = vrot.slane %v636, %v678
    %v680 = vlaneseq
    %v681 = vshrl.u32 %v680, 7
    %v682 = vsub.s32 1, %v681
    %v683 = vrot.slane %v637, %v682
    %v684 = vmul.f32 %v671, %v645
    %v685 = vmul.f32 %v675, %v645
    %v686 = vmul.f32 %v679, %v645
    %v687 = vmul.f32 %v683, %v645
    %v688 = vadd.f32 %v664, %v684
    %v689 = vadd.f32 %v665, %v685
    %v690 = vadd.f32 %v666, %v686
    %v691 = vadd.f32 %v667, %v687
    %v692 = vlaneseq
    %v693 = vshrl.u32 %v692, 7
    %v694 = vsub.s32 2, %v693
    %v695 = vrot.slane %v634, %v694
    %v696 = vlaneseq
    %v697 = vshrl.u32 %v696, 7
    %v698 = vsub.s32 2, %v697
    %v699 = vrot.slane %v635, %v698
    %v700 = vlaneseq
    %v701 = vshrl.u32 %v700, 7
    %v702 = vsub.s32 2, %v701
    %v703 = vrot.slane %v636, %v702
    %v704 = vlaneseq
    %v705 = vshrl.u32 %v704, 7
    %v706 = vsub.s32 2, %v705
    %v707 = vrot.slane %v637, %v706
    %v708 = vmul.f32 %v695, %v646
    %v709 = vmul.f32 %v699, %v646
    %v710 = vmul.f32 %v703, %v646
    %v711 = vmul.f32 %v707, %v646
    %v712 = vadd.f32 %v688, %v708
    %v713 = vadd.f32 %v689, %v709
    %v714 = vadd.f32 %v690, %v710
    %v715 = vadd.f32 %v691, %v711
    %v716 = vlaneseq
    %v717 = vshrl.u32 %v716, 7
    %v718 = vsub.s32 3, %v717
    %v719 = vrot.slane %v634, %v718
    %v720 = vlaneseq
    %v721 = vshrl.u32 %v720, 7
    %v722 = vsub.s32 3, %v721
    %v723 = vrot.slane %v635, %v722
    %v724 = vlaneseq
    %v725 = vshrl.u32 %v724, 7
    %v726 = vsub.s32 3, %v725
    %v727 = vrot.slane %v636, %v726
    %v728 = vlaneseq
    %v729 = vshrl.u32 %v728, 7
    %v730 = vsub.s32 3, %v729
    %v731 = vrot.slane %v637, %v730
    %v732 = vmul.f32 %v719, %v647
    %v733 = vmul.f32 %v723, %v647
    %v734 = vmul.f32 %v727, %v647
    %v735 = vmul.f32 %v731, %v647
    %v736 = vadd.f32 %v712, %v732
    %v737 = vadd.f32 %v713, %v733
    %v738 = vadd.f32 %v714, %v734
    %v739 = vadd.f32 %v715, %v735
    %s740 = scalar_lea.vmem [#allocation5], 112
    %741 = vst [vmem:[%s740] sm:$0xf] %v736
    %742 = vst [vmem:[%s740 + $0x4] sm:$0xf] %v737
    %743 = vst [vmem:[%s740 + $0x8] sm:$0xf] %v738
    %744 = vst [vmem:[%s740 + $0xc] sm:$0xf] %v739
    %s745 = scalar_lea.vmem [#allocation5], 128
    %746 = vst [vmem:[%s745] sm:$0xf] %v736
    %747 = vst [vmem:[%s745 + $0x4] sm:$0xf] %v737
    %748 = vst [vmem:[%s745 + $0x8] sm:$0xf] %v738
    %749 = vst [vmem:[%s745 + $0xc] sm:$0xf] %v739
    // Predicated region
    $region10: #{tpu_custom_call.1} parent=1 // pred_check
      _
    $region11: #{tpu_custom_call.1} parent=1 // pred_check_branch
      %751 = sbr.rel (0) target = $region13
    $region12: #{tpu_custom_call.1} parent=1 // pred_region
      %s753 = ssub.s32 2304, 2304
      %754 = vsyncadd [#allocation4], %s753
      %s755 = sshll.u32 [#allocation5], 4
      %s756 = int_to_ptr.vmem [resolvable:$true] %s755
      %761 = dma.vmem_to_hbm [thread:$0]  %s756, 2304, %s1, [#allocation4], 64, 64, 4
    $region13: #{tpu_custom_call.1} parent=1 // pred_fallthru
      _
    // Predicated region
    $region14: #{tpu_custom_call.1} parent=1 // pred_check
      _
    $region15: #{tpu_custom_call.1} parent=1 // pred_check_branch
      %763 = sbr.rel (0) target = $region17
    $region16: #{tpu_custom_call.1} parent=1 // pred_region
      %764 = dma.done [#allocation4], 2304
    $region17: #{tpu_custom_call.1} parent=1 // pred_fallthru
      _
    %765 = vsyncpa [#allocation3], 1
    %766 = vsyncpa [#allocation4], 1

</llo_original>
